<compile_context>
chip_gen: v5e
topology: v5e:2x2
jax: 0.10.0
libtpu: 0.0.40
codegen_flags: <defaults>
</compile_context>

<pallas_src>
import functools
import math

import jax
import jax.numpy as jnp
from jax import lax
from jax.experimental import pallas as pl
from jax.experimental.pallas import tpu as pltpu


# ---------------------------------------------------------------------------
# Kernel 1: STFT magnitude  (windowed DFT as two MXU matmuls + |.|)
#   frames (time) on lanes, frequency bins on sublanes.
# ---------------------------------------------------------------------------
def _stft_mag_kernel(cos_ref, sin_ref, fr_ref, o_ref):
    fr = fr_ref[...]                                            # (n_fft, Ht)
    re = jnp.dot(cos_ref[...], fr, preferred_element_type=jnp.float32)
    im = jnp.dot(sin_ref[...], fr, preferred_element_type=jnp.float32)
    o_ref[...] = jnp.sqrt(re * re + im * im)


def stft_magnitude(x_bt, *, n_fft, hop_size, win_length, frame_tile=128):
    """Returns |STFT| of shape (B, n_fft//2+1, num_frames), frames on last axis."""
    B, T = x_bt.shape
    pad = win_length // 2
    x1 = jnp.pad(x_bt, ((0, 0), (pad, pad)))                            # constant
    x2 = jnp.pad(x1, ((0, 0), (n_fft // 2, n_fft // 2)), mode="reflect")
    num_frames = (x2.shape[1] - n_fft) // hop_size + 1
    n_bins = n_fft // 2 + 1

    # Overlapping-frame extraction (im2col over time) is plain-JAX glue.
    idx = jnp.arange(n_fft)[:, None] + hop_size * jnp.arange(num_frames)[None, :]
    frames = jnp.take(x2, idx, axis=1)                                  # (B, n_fft, frames)

    n_t = pl.cdiv(num_frames, frame_tile)
    fpad = n_t * frame_tile
    frames = jnp.pad(frames, ((0, 0), (0, 0), (0, fpad - num_frames)))

    # Windowed real/imag DFT matrices (hann, periodic, centered in n_fft).
    win = 0.5 - 0.5 * jnp.cos(2.0 * jnp.pi * jnp.arange(win_length) / win_length)
    lpad = (n_fft - win_length) // 2
    win = jnp.pad(win, (lpad, n_fft - win_length - lpad))
    ang = (2.0 * jnp.pi / n_fft) * (jnp.arange(n_bins)[:, None]
                                    * jnp.arange(n_fft)[None, :])
    cos_m = (jnp.cos(ang) * win[None, :]).astype(jnp.float32)
    sin_m = (jnp.sin(ang) * win[None, :]).astype(jnp.float32)

    mag = pl.pallas_call(
        _stft_mag_kernel,
        out_shape=jax.ShapeDtypeStruct((B, n_bins, fpad), jnp.float32),
        grid=(B, n_t),
        in_specs=[
            pl.BlockSpec((n_bins, n_fft), lambda b, t: (0, 0)),
            pl.BlockSpec((n_bins, n_fft), lambda b, t: (0, 0)),
            pl.BlockSpec((None, n_fft, frame_tile), lambda b, t: (b, 0, t)),
        ],
        out_specs=pl.BlockSpec((None, n_bins, frame_tile), lambda b, t: (b, 0, t)),
        compiler_params=pltpu.CompilerParams(
            dimension_semantics=("parallel", "parallel")),
    )(cos_m, sin_m, frames.astype(jnp.float32))
    return mag[:, :, :num_frames]


# ---------------------------------------------------------------------------
# Kernel 2: NonCausalConv2d (+ optional LeakyReLU), one layer.
#   Layout: (freq W, channels C, frames H); H (time) on lanes.
#   grid = (batch, time-tile);  per output frequency: kh matmuls with
#   contraction K = kw*C_in and lane-dense (C_out, h_tile) result.
# ---------------------------------------------------------------------------
def _conv2d_act_kernel(x_ref, w_ref, b_ref, o_ref, *, stride_w, act, neg_slope):
    """x_ref: (W_in, C_in, H_in) bf16 (zero-padded)
       w_ref: (kh, C_out, kw*C_in) bf16
       b_ref: (C_out, 1) f32
       o_ref: (W_out, C_out, h_tile) f32
    """
    w_out, c_out, h_tile = o_ref.shape
    c_in = x_ref.shape[1]
    kh = w_ref.shape[0]
    kw = w_ref.shape[2] // c_in
    h0 = pl.program_id(1) * h_tile          # start (in padded frames) of this tile

    def body(wo, carry):
        w_start = wo * stride_w
        acc = jnp.zeros((c_out, h_tile), jnp.float32)
        for dh in range(kh):
            if c_in == 1:
                patch = x_ref[pl.ds(w_start, kw), 0, pl.ds(h0 + dh, h_tile)]
            else:
                patch = x_ref[pl.ds(w_start, kw), :, pl.ds(h0 + dh, h_tile)]
                patch = patch.reshape(kw * c_in, h_tile)
            acc = acc + jnp.dot(w_ref[dh], patch,
                                preferred_element_type=jnp.float32)
        acc = acc + b_ref[...]
        if act:
            acc = jnp.where(acc >= 0, acc, neg_slope * acc)
        o_ref[wo] = acc.astype(o_ref.dtype)
        return carry

    lax.fori_loop(0, w_out, body, 0)


def conv2d_layer(x_bwch, w, b, *, stride_w, act, neg_slope=0.2, h_tile=128,
                 compute_dtype=jnp.bfloat16):
    """One NonCausalConv2d layer (stride 1 along frames, stride_w along freq).

    x_bwch: (B, W, C_in, H)  - freq outer, frames (time) on the last axis.
    w:      (C_out, C_in, kh, kw)   PyTorch Conv2d weight layout.
    b:      (C_out,)
    Returns (B, W_out, C_out, H) float32.
    """
    B, W, C_in, H = x_bwch.shape
    C_out, c_in_w, kh, kw = w.shape
    assert c_in_w == C_in and kh % 2 == 1 and kw % 2 == 1
    ph, pw = (kh - 1) // 2, (kw - 1) // 2
    W_in = W + 2 * pw
    W_out = (W_in - kw) // stride_w + 1
    n_t = pl.cdiv(H, h_tile)
    H_in = n_t * h_tile + (kh - 1)

    # Zero padding (freq + frames) and bf16 cast: plain-JAX glue, one pass.
    # TODO(synk): handle the edge padding with in-kernel masking to drop this pass.
    x_pad = jnp.pad(x_bwch, ((0, 0), (pw, pw), (0, 0), (ph, H_in - ph - H)))
    x_pad = x_pad.astype(compute_dtype)

    # w_r[dh, co, dw*C_in + ci] = w[co, ci, dh, dw]
    w_r = jnp.transpose(w, (2, 0, 3, 1)).reshape(kh, C_out, kw * C_in)
    w_r = w_r.astype(compute_dtype)
    b_r = b.reshape(C_out, 1).astype(jnp.float32)

    kern = functools.partial(_conv2d_act_kernel, stride_w=stride_w, act=act,
                             neg_slope=neg_slope)

    out = pl.pallas_call(
        kern,
        out_shape=jax.ShapeDtypeStruct((B, W_out, C_out, n_t * h_tile),
                                       jnp.float32),
        grid=(B, n_t),
        in_specs=[
            # Per-batch input block (re-used across the inner time-tile axis).
            pl.BlockSpec((None, W_in, C_in, H_in), lambda bi, ti: (bi, 0, 0, 0)),
            pl.BlockSpec((kh, C_out, kw * C_in), lambda bi, ti: (0, 0, 0)),
            pl.BlockSpec((C_out, 1), lambda bi, ti: (0, 0)),
        ],
        out_specs=pl.BlockSpec((None, W_out, C_out, h_tile),
                               lambda bi, ti: (bi, 0, 0, ti)),
        compiler_params=pltpu.CompilerParams(
            dimension_semantics=("parallel", "parallel")),
    )(x_pad, w_r, b_r)
    return out[:, :, :, :H]


# ---------------------------------------------------------------------------
# Parameters mirroring UnivNetSpectralDiscriminator.__init__
# ---------------------------------------------------------------------------
def build_discriminator_params(key, *,
                               kernel_sizes=((3, 9), (3, 9), (3, 9), (3, 9),
                                             (3, 3), (3, 3)),
                               strides=((1, 1), (1, 2), (1, 2), (1, 2),
                                        (1, 1), (1, 1)),
                               channels=32,
                               negative_slope=0.2):
    assert len(kernel_sizes) == len(strides)
    n = len(kernel_sizes)
    cfgs = [dict(cin=1, cout=channels, k=kernel_sizes[0], s=strides[0], act=True)]
    for i in range(1, n - 2):
        cfgs.append(dict(cin=channels, cout=channels, k=kernel_sizes[i],
                         s=strides[i], act=True))
    cfgs.append(dict(cin=channels, cout=channels, k=kernel_sizes[-2],
                     s=strides[-2], act=True))
    cfgs.append(dict(cin=channels, cout=1, k=kernel_sizes[-1],
                     s=strides[-1], act=False))

    params = []
    for cfg in cfgs:
        kh, kw = cfg["k"]
        sh, sw = cfg["s"]
        assert sh == 1 and kh % 2 == 1 and kw % 2 == 1
        key, k_w, k_b = jax.random.split(key, 3)
        fan_in = cfg["cin"] * kh * kw
        bound = 1.0 / math.sqrt(fan_in)
        w = jax.random.uniform(k_w, (cfg["cout"], cfg["cin"], kh, kw),
                               jnp.float32, -bound, bound)
        b = jax.random.uniform(k_b, (cfg["cout"],), jnp.float32, -bound, bound)
        params.append(dict(w=w, b=b, stride_w=sw, act=cfg["act"],
                           neg_slope=negative_slope))
    return params


def univnet_spectral_discriminator_forward(x_b1t, params, *, fft_size, hop_size,
                                           win_length, h_tile=128):
    """x_b1t: (B, 1, T).  Returns list of layer outputs in PyTorch (B, C, H, W)."""
    B = x_b1t.shape[0]
    x_bt = x_b1t.reshape(B, -1)
    spec = stft_magnitude(x_bt, n_fft=fft_size, hop_size=hop_size,
                          win_length=win_length, frame_tile=h_tile)
    # (B, F, frames) == in-kernel layout (B, W=freq, C=1, H=frames)
    x = spec[:, :, None, :]
    outs = []
    for p in params:
        x = conv2d_layer(x, p["w"], p["b"], stride_w=p["stride_w"],
                         act=p["act"], neg_slope=p["neg_slope"], h_tile=h_tile)
        outs.append(jnp.transpose(x, (0, 2, 3, 1)))     # -> (B, C, frames, freq)
    return outs


# ---------------------------------------------------------------------------
# Pure-JAX references for self-verification
# ---------------------------------------------------------------------------
def _reference_spectrogram(x_bt, n_fft, hop, win_length):
    pad = win_length // 2
    x1 = jnp.pad(x_bt, ((0, 0), (pad, pad)))
    x2 = jnp.pad(x1, ((0, 0), (n_fft // 2, n_fft // 2)), mode="reflect")
    num_frames = (x2.shape[1] - n_fft) // hop + 1
    idx = hop * jnp.arange(num_frames)[:, None] + jnp.arange(n_fft)[None, :]
    frames = jnp.take(x2, idx, axis=1)                       # (B, frames, n_fft)
    win = 0.5 - 0.5 * jnp.cos(2.0 * jnp.pi * jnp.arange(win_length) / win_length)
    lpad = (n_fft - win_length) // 2
    win = jnp.pad(win, (lpad, n_fft - win_length - lpad))
    spec = jnp.abs(jnp.fft.rfft(frames * win[None, None, :], axis=-1))
    return jnp.transpose(spec, (0, 2, 1))                    # (B, F, frames)


def _reference_convs(x_nchw, params, compute_dtype=jnp.bfloat16):
    outs, x = [], x_nchw
    for p in params:
        kh, kw = p["w"].shape[2], p["w"].shape[3]
        ph, pw = (kh - 1) // 2, (kw - 1) // 2
        y = lax.conv_general_dilated(
            x.astype(compute_dtype), p["w"].astype(compute_dtype),
            window_strides=(1, p["stride_w"]),
            padding=[(ph, ph), (pw, pw)],
            dimension_numbers=("NCHW", "OIHW", "NCHW"),
            preferred_element_type=jnp.float32)
        y = y + p["b"][None, :, None, None]
        if p["act"]:
            y = jnp.where(y >= 0, y, p["neg_slope"] * y)
        x = y
        outs.append(y)
    return outs


if __name__ == "__main__":
    key = jax.random.PRNGKey(0)
    kx, kp = jax.random.split(key)

    fft_size, hop_size, win_length = 256, 32, 256
    B, T = 2, 4096
    x = jax.random.normal(kx, (B, 1, T), jnp.float32)

    params = build_discriminator_params(kp, channels=32)

    outs = univnet_spectral_discriminator_forward(
        x, params, fft_size=fft_size, hop_size=hop_size, win_length=win_length)
    outs = [jax.block_until_ready(o) for o in outs]

    # --- self-check 1: STFT-magnitude kernel vs rfft reference -------------
    x_bt = x.reshape(B, T)
    spec_ref = _reference_spectrogram(x_bt, fft_size, hop_size, win_length)
    spec_pallas = stft_magnitude(x_bt, n_fft=fft_size, hop_size=hop_size,
                                 win_length=win_length)
    err = float(jnp.max(jnp.abs(spec_pallas - spec_ref)))
    scale = float(jnp.max(jnp.abs(spec_ref))) + 1e-6
    assert err <= 1e-3 * scale, (err, scale)

    # --- self-check 2: conv stack vs lax.conv reference (same bf16 policy) -
    x_nchw = jnp.transpose(spec_pallas, (0, 2, 1))[:, None]   # (B,1,frames,F)
    refs = _reference_convs(x_nchw, params)
    for o, r in zip(outs, refs):
        assert o.shape == r.shape, (o.shape, r.shape)
        err = float(jnp.max(jnp.abs(o - r)))
        scale = float(jnp.max(jnp.abs(r))) + 1e-6
        assert err <= 2e-2 * scale, (err, scale)

    print("KERNEL_OK")
</pallas_src>

<mosaic_0001>
module attributes {stable_mosaic.version = 11 : i64} {
  func.func @_stft_mag_kernel(%arg0: i32, %arg1: i32, %arg2: memref<129x256xf32, #tpu.memory_space<vmem>>, %arg3: memref<129x256xf32, #tpu.memory_space<vmem>>, %arg4: memref<1x256x128xf32, #tpu.memory_space<vmem>>, %arg5: memref<1x129x128xf32, #tpu.memory_space<vmem>>) attributes {dimension_semantics = [#tpu.dimension_semantics<parallel>, #tpu.dimension_semantics<parallel>], iteration_bounds = array<i64: 2, 2>, scalar_prefetch = 0 : i64, scratch_operands = 0 : i64, tpu.core_type = #tpu.core_type<tc>, window_params = [{pipeline_mode = #tpu.pipeline_mode<synchronous>, transform_indices = @transform_0, window_bounds = array<i64: 129, 256>}, {pipeline_mode = #tpu.pipeline_mode<synchronous>, transform_indices = @transform_1, window_bounds = array<i64: 129, 256>}, {transform_indices = @transform_2, window_bounds = array<i64: 1, 256, 128>}, {transform_indices = @transform_3, window_bounds = array<i64: 1, 129, 128>}]} {
    %c0 = arith.constant 0 : index
    %c0_0 = arith.constant 0 : index
    %c0_1 = arith.constant 0 : index
    %0 = vector.load %arg4[%c0, %c0_0, %c0_1] : memref<1x256x128xf32, #tpu.memory_space<vmem>>, vector<1x256x128xf32>
    %1 = vector.shape_cast %0 : vector<1x256x128xf32> to vector<256x128xf32>
    %c0_2 = arith.constant 0 : index
    %c0_3 = arith.constant 0 : index
    %2 = vector.load %arg2[%c0_2, %c0_3] : memref<129x256xf32, #tpu.memory_space<vmem>>, vector<129x256xf32>
    %cst = arith.constant dense<0.000000e+00> : vector<129x128xf32>
    %3 = tpu.matmul %2, %1, %cst {dimension_numbers = #tpu.dot_dimension_numbers<[1], [0], [0], [1], [0, 0, 1, 1], [], []>} : vector<129x256xf32>, vector<256x128xf32>, vector<129x128xf32> -> vector<129x128xf32>
    %c0_4 = arith.constant 0 : index
    %c0_5 = arith.constant 0 : index
    %4 = vector.load %arg3[%c0_4, %c0_5] : memref<129x256xf32, #tpu.memory_space<vmem>>, vector<129x256xf32>
    %cst_6 = arith.constant dense<0.000000e+00> : vector<129x128xf32>
    %5 = tpu.matmul %4, %1, %cst_6 {dimension_numbers = #tpu.dot_dimension_numbers<[1], [0], [0], [1], [0, 0, 1, 1], [], []>} : vector<129x256xf32>, vector<256x128xf32>, vector<129x128xf32> -> vector<129x128xf32>
    %6 = arith.mulf %3, %3 : vector<129x128xf32>
    %7 = arith.mulf %5, %5 : vector<129x128xf32>
    %8 = arith.addf %6, %7 : vector<129x128xf32>
    %9 = math.sqrt %8 : vector<129x128xf32>
    %c0_7 = arith.constant 0 : index
    %c0_8 = arith.constant 0 : index
    %c0_9 = arith.constant 0 : index
    %10 = vector.load %arg5[%c0_7, %c0_8, %c0_9] : memref<1x129x128xf32, #tpu.memory_space<vmem>>, vector<1x129x128xf32>
    %11 = vector.shape_cast %10 : vector<1x129x128xf32> to vector<129x128xf32>
    %12 = vector.shape_cast %9 : vector<129x128xf32> to vector<1x129x128xf32>
    tpu.vector_store %arg5[%c0_7, %c0_8, %c0_9], %12 {strides = array<i32>} : memref<1x129x128xf32, #tpu.memory_space<vmem>>, vector<1x129x128xf32>,
    return
  }
  func.func @transform_0(%arg0: i32, %arg1: i32) -> (i32, i32) {
    %c0_i32 = arith.constant 0 : i32
    %c0_i32_0 = arith.constant 0 : i32
    %c0_i32_1 = arith.constant 0 : i32
    return %c0_i32, %c0_i32_0 : i32, i32
  }
  func.func @transform_1(%arg0: i32, %arg1: i32) -> (i32, i32) {
    %c0_i32 = arith.constant 0 : i32
    %c0_i32_0 = arith.constant 0 : i32
    %c0_i32_1 = arith.constant 0 : i32
    return %c0_i32, %c0_i32_0 : i32, i32
  }
  func.func @transform_2(%arg0: i32, %arg1: i32) -> (i32, i32, i32) {
    %c0_i32 = arith.constant 0 : i32
    %c0_i32_0 = arith.constant 0 : i32
    return %arg0, %c0_i32, %arg1 : i32, i32, i32
  }
  func.func @transform_3(%arg0: i32, %arg1: i32) -> (i32, i32, i32) {
    %c0_i32 = arith.constant 0 : i32
    %c0_i32_0 = arith.constant 0 : i32
    return %arg0, %c0_i32, %arg1 : i32, i32, i32
  }
}

</mosaic_0001>

<llo_original>
// kernel: tpu_custom_call.1
$region0: #{tpu_custom_call.1}
  #allocation0 [shape = 'u32[]', space=smem, size = 0x4, offset = 0x4, fixed_abs, tag = 'smem constant byte address 0x4 - core index']
  #allocation1 [shape = 'u32[72,128]{1,0:T(1,128)}', space=vmem, size = 0x9000, scoped, tag = 'internal scratch']
  %s0 = inlined_call_operand.hbm [shape: f32[129,256], index: 0, kind: input, shape index: {}]
  %s1 = inlined_call_operand.hbm [shape: f32[129,256], index: 1, kind: input, shape index: {}]
  %s2 = inlined_call_operand.hbm [shape: f32[2,256,256], index: 2, kind: input, shape index: {}]
  %s3 = inlined_call_operand.vmem [shape: f32[2,129,256], index: 3, kind: output, shape index: {}]
  %s4 = sld [smem:[#allocation0]]
  $region91: #{tpu_custom_call.1} parent=0
    _
  %s6 = ssub.s32 1, %s4
  %s7 = scalar_select 0, %s6, %s4
  $region1: #{tpu_custom_call.1} parent=0
    #allocation2 [shape = 'u8[139264]{0}', space=vmem, size = 0x22000, scoped, tag = 'input window, operand 0, single buffered']
    #allocation3 [shape = 's32[2]{0}', space=sflag, size = 0x8, scoped, tag = 'scoped memory for tpu_custom_call.1']
    #allocation4 [shape = 'u8[139264]{0}', space=vmem, size = 0x22000, scoped, tag = 'input window, operand 1, single buffered']
    #allocation5 [shape = 's32[1]{0}', space=sflag, size = 0x4, scoped, tag = 'scoped memory for tpu_custom_call.1']
    #allocation6 [shape = 'u8[262144]{0}', space=vmem, size = 0x40000, scoped, tag = 'input window, operand 2']
    #allocation7 [shape = 'u8[139264]{0}', space=vmem, size = 0x22000, scoped, tag = 'output window, operand 0']
    %8 = vsyncpa [#allocation3], 0
    %9 = vsyncpa [#allocation5], 0
    loop: start=0, step=1, limit=6
    $region2: #{tpu_custom_call.1} parent=1 // loop_pre_header
      _
    $region3: #{tpu_custom_call.1} parent=1 // loop_header
      %s11 = sphi 0, %s15
      %p12 = scmp.ge.s32.totalorder %s11, 6
      %s18 = sphi 0, %s30
      %s19 = sphi 0, %s26
      %s20 = sphi 0, %s18
      %s21 = sphi 0, %s19
      %s22 = sphi 0, %s20
      %s23 = sphi 0, %s21
      %s31 = sphi 0, %s31
      %s33 = sphi 0, %s31
      %s34 = sphi 0, %s33
      %s48 = sphi 0, %s34
      %s52 = sphi 0, %s52
      %s54 = sphi 0, %s52
      %s55 = sphi 0, %s54
      %s69 = sphi 0, %s55
      %s77 = sphi 0, %s79
      %s80 = sphi 0, %s77
      %s81 = sphi 0, %s80
      %s97 = sphi 0, %s81
      %s105 = sphi 0, %s107
      %s108 = sphi 0, %s105
      %s109 = sphi 0, %s108
      %s125 = sphi 0, %s109
    $region4: #{tpu_custom_call.1} parent=1 // loop_header_branch
      %14 = sbr.rel (%p12) target = $region8
    $region5: #{tpu_custom_call.1} parent=1 // loop_body
      %s16 = ssub.s32 %s11, 1
      %s17 = ssub.s32 %s11, 2
      %s24 = sadd.s32 1, %s19
      %p25 = scmp.ge.s32.totalorder %s24, 2
      %s26 = scalar_select %p25, 0, %s24
      %s27 = sadd.s32 1, %s18
      %s28 = scalar_select %p25, %s27, %s18
      %p29 = scmp.ge.s32.totalorder %s28, 2
      %s30 = scalar_select %p29, 0, %s28
      %s32 = sadd.s32 %s31, 1
      %p35 = scmp.eq.s32.totalorder %s11, 3
      %p36 = scmp.ne.s32.totalorder %s31, %s33
      %p37 = scmp.eq.s32.totalorder %s11, 0
      %p38 = por %p36, %p37
      %p39 = scmp.ne.s32.totalorder %s31, %s33
      %p40 = scmp.eq.s32.totalorder %s16, 3
      %p41 = por %p39, %p40
      %p42 = scmp.ne.s32.totalorder %s33, %s34
      %p43 = scmp.eq.s32.totalorder %s16, 0
      %p44 = por %p42, %p43
      %p45 = scmp.ne.s32.totalorder %s33, %s34
      %p46 = scmp.eq.s32.totalorder %s17, 3
      %p47 = por %p45, %p46
      %p49 = scmp.ne.s32.totalorder %s34, %s48
      %p50 = scmp.eq.s32.totalorder %s17, 0
      %p51 = por %p49, %p50
      %s53 = sadd.s32 %s52, 1
      %p56 = scmp.eq.s32.totalorder %s11, 3
      %p57 = scmp.ne.s32.totalorder %s52, %s54
      %p58 = scmp.eq.s32.totalorder %s11, 0
      %p59 = por %p57, %p58
      %p60 = scmp.ne.s32.totalorder %s52, %s54
      %p61 = scmp.eq.s32.totalorder %s16, 3
      %p62 = por %p60, %p61
      %p63 = scmp.ne.s32.totalorder %s54, %s55
      %p64 = scmp.eq.s32.totalorder %s16, 0
      %p65 = por %p63, %p64
      %p66 = scmp.ne.s32.totalorder %s54, %s55
      %p67 = scmp.eq.s32.totalorder %s17, 3
      %p68 = por %p66, %p67
      %p70 = scmp.ne.s32.totalorder %s55, %s69
      %p71 = scmp.eq.s32.totalorder %s17, 0
      %p72 = por %p70, %p71
      %s73 = ssub.s32 %s18, %s30
      %s74 = ssub.s32 %s19, %s26
      %s75 = sor.u32 %s73, %s74
      %p76 = scmp.eq.s32.totalorder %s75, 0
      %s78 = sadd.s32 %s77, 1
      %s79 = scalar_select %p76, %s77, %s78
      %p82 = pneg %p76
      %p83 = scmp.eq.s32.totalorder %s11, 3
      %p84 = por %p82, %p83
      %p85 = scmp.ne.s32.totalorder %s77, %s80
      %p86 = scmp.eq.s32.totalorder %s11, 0
      %p87 = por %p85, %p86
      %p88 = scmp.ne.s32.totalorder %s77, %s80
      %p89 = scmp.eq.s32.totalorder %s16, 3
      %p90 = por %p88, %p89
      %p91 = scmp.ne.s32.totalorder %s80, %s81
      %p92 = scmp.eq.s32.totalorder %s16, 0
      %p93 = por %p91, %p92
      %p94 = scmp.ne.s32.totalorder %s80, %s81
      %p95 = scmp.eq.s32.totalorder %s17, 3
      %p96 = por %p94, %p95
      %p98 = scmp.ne.s32.totalorder %s81, %s97
      %p99 = scmp.eq.s32.totalorder %s17, 0
      %p100 = por %p98, %p99
      %s101 = ssub.s32 %s18, %s30
      %s102 = ssub.s32 %s19, %s26
      %s103 = sor.u32 %s101, %s102
      %p104 = scmp.eq.s32.totalorder %s103, 0
      %s106 = sadd.s32 %s105, 1
      %s107 = scalar_select %p104, %s105, %s106
      %p110 = pneg %p104
      %p111 = scmp.eq.s32.totalorder %s11, 3
      %p112 = por %p110, %p111
      %p113 = scmp.ne.s32.totalorder %s105, %s108
      %p114 = scmp.eq.s32.totalorder %s11, 0
      %p115 = por %p113, %p114
      %p116 = scmp.ne.s32.totalorder %s105, %s108
      %p117 = scmp.eq.s32.totalorder %s16, 3
      %p118 = por %p116, %p117
      %p119 = scmp.ne.s32.totalorder %s108, %s109
      %p120 = scmp.eq.s32.totalorder %s16, 0
      %p121 = por %p119, %p120
      %p122 = scmp.ne.s32.totalorder %s108, %s109
      %p123 = scmp.eq.s32.totalorder %s17, 3
      %p124 = por %p122, %p123
      %p126 = scmp.ne.s32.totalorder %s109, %s125
      %p127 = scmp.eq.s32.totalorder %s17, 0
      %p128 = por %p126, %p127
      %p129 = scmp.le.s32.totalorder 1, %s11
      %p130 = scmp.lt.s32.totalorder %s11, 5
      %p131 = pnand %p129, %p130
      %p132 = pneg %p131
      // Predicated region
      $region9: #{tpu_custom_call.1} parent=5 // pred_check
        _
      $region10: #{tpu_custom_call.1} parent=5 // pred_check_branch
        %134 = sbr.rel (%p131) target = $region12
      $region11: #{tpu_custom_call.1} parent=5 // pred_region
        %s135 = ssub.s32 %s11, 1
        // Predicated region
        $region13: #{tpu_custom_call.1} parent=11 // pred_check
          %p136 = pneg %p44
        $region14: #{tpu_custom_call.1} parent=11 // pred_check_branch
          %138 = sbr.rel (%p136) target = $region16
        $region15: #{tpu_custom_call.1} parent=11 // pred_region
          %140 = vsyncadd [#allocation3], 0
          %s141 = sshll.u32 %s0, 4
          %s142 = int_to_ptr.hbm [resolvable:$true] %s141
          %s143 = sshll.u32 [#allocation2], 4
          %s144 = int_to_ptr.vmem [resolvable:$true] %s143
          %149 = dma.hbm_to_vmem [thread:$0]  %s142, 4352, %s144, [#allocation3], 256, 256, 16
        $region16: #{tpu_custom_call.1} parent=11 // pred_fallthru
          _
        // Predicated region
        $region17: #{tpu_custom_call.1} parent=11 // pred_check
          %p150 = pneg %p65
        $region18: #{tpu_custom_call.1} parent=11 // pred_check_branch
          %152 = sbr.rel (%p150) target = $region20
        $region19: #{tpu_custom_call.1} parent=11 // pred_region
          %154 = vsyncadd [#allocation5], 0
          %s155 = sshll.u32 %s1, 4
          %s156 = int_to_ptr.hbm [resolvable:$true] %s155
          %s157 = sshll.u32 [#allocation4], 4
          %s158 = int_to_ptr.vmem [resolvable:$true] %s157
          %163 = dma.hbm_to_vmem [thread:$0]  %s156, 4352, %s158, [#allocation5], 256, 256, 16
        $region20: #{tpu_custom_call.1} parent=11 // pred_fallthru
          _
      $region12: #{tpu_custom_call.1} parent=5 // pred_fallthru
        _
      %p164 = scmp.lt.s32.totalorder %s11, 4
      // Predicated region
      $region21: #{tpu_custom_call.1} parent=5 // pred_check
        %p165 = pneg %p164
      $region22: #{tpu_custom_call.1} parent=5 // pred_check_branch
        %167 = sbr.rel (%p165) target = $region24
      $region23: #{tpu_custom_call.1} parent=5 // pred_region
        // Predicated region
        $region25: #{tpu_custom_call.1} parent=23 // pred_check
          %p168 = pneg %p87
        $region26: #{tpu_custom_call.1} parent=23 // pred_check_branch
          %170 = sbr.rel (%p168) target = $region28
        $region27: #{tpu_custom_call.1} parent=23 // pred_region
          %s171 = sand.u32 %s11, 1
          %s172 = scalar_lea.sflag [#allocation3], %s171
          %s173 = sand.u32 %s77, 1
          %s174 = smul.addr %s173, 256
          %s175 = scalar_lea.vmem [#allocation6], %s174
          %177 = vsyncadd %s172, 0
          %s178 = smul.addr %s18, 64
          %s179 = sadd.s32 %s19, %s178
          %s180 = smul.addr %s179, 8
          %s181 = scalar_lea.hbm %s2, %s180
          %s182 = sshll.u32 %s181, 4
          %s183 = int_to_ptr.hbm [resolvable:$true] %s182
          %s184 = sshll.u32 %s175, 4
          %s185 = int_to_ptr.vmem [resolvable:$true] %s184
          %190 = dma.hbm_to_vmem [thread:$0]  %s183, 4096, %s185, %s172, 256, 128, 8
        $region28: #{tpu_custom_call.1} parent=23 // pred_fallthru
          _
      $region24: #{tpu_custom_call.1} parent=5 // pred_fallthru
        _
      %p191 = scmp.le.s32.totalorder 1, %s11
      %p192 = scmp.lt.s32.totalorder %s11, 5
      %p193 = pnand %p191, %p192
      %p194 = pneg %p193
      // Predicated region
      $region29: #{tpu_custom_call.1} parent=5 // pred_check
        _
      $region30: #{tpu_custom_call.1} parent=5 // pred_check_branch
        %196 = sbr.rel (%p193) target = $region32
      $region31: #{tpu_custom_call.1} parent=5 // pred_region
        %s197 = ssub.s32 %s11, 1
        // Predicated region
        $region33: #{tpu_custom_call.1} parent=31 // pred_check
          %p198 = pneg %p44
        $region34: #{tpu_custom_call.1} parent=31 // pred_check_branch
          %200 = sbr.rel (%p198) target = $region36
        $region35: #{tpu_custom_call.1} parent=31 // pred_region
          %202 = dma.done [#allocation3], 4352
        $region36: #{tpu_custom_call.1} parent=31 // pred_fallthru
          _
        // Predicated region
        $region37: #{tpu_custom_call.1} parent=31 // pred_check
          %p203 = pneg %p65
        $region38: #{tpu_custom_call.1} parent=31 // pred_check_branch
          %205 = sbr.rel (%p203) target = $region40
        $region39: #{tpu_custom_call.1} parent=31 // pred_region
          %207 = dma.done [#allocation5], 4352
        $region40: #{tpu_custom_call.1} parent=31 // pred_fallthru
          _
        %s208 = sand.u32 %s16, 1
        %s209 = scalar_lea.sflag [#allocation3], %s208
        %s210 = sand.u32 %s80, 1
        %s211 = smul.addr %s210, 256
        %s212 = scalar_lea.vmem [#allocation6], %s211
        // Predicated region
        $region41: #{tpu_custom_call.1} parent=31 // pred_check
          %p213 = pneg %p93
        $region42: #{tpu_custom_call.1} parent=31 // pred_check_branch
          %215 = sbr.rel (%p213) target = $region44
        $region43: #{tpu_custom_call.1} parent=31 // pred_region
          %217 = dma.done %s209, 4096
        $region44: #{tpu_custom_call.1} parent=31 // pred_fallthru
          _
        %p218 = pneg %p44
        %p219 = pneg %p41
        %p220 = pneg %p65
        %p221 = pneg %p62
        %s222 = sand.u32 %s16, 1
        %s223 = scalar_lea.sflag [#allocation3], %s222
        %s224 = sand.u32 %s80, 1
        %s225 = smul.addr %s224, 256
        %s226 = scalar_lea.vmem [#allocation6], %s225
        %p227 = pneg %p93
        %p228 = pneg %p90
        %p229 = pneg %p121
        %p230 = pneg %p118
        %s231 = sand.u32 %s108, 1
        %s232 = sand.u32 %s108, 1
        %s233 = smul.addr %s232, 136
        %s234 = scalar_lea.vmem [#allocation7], %s233
        %v235 = vld [vmem:[%s212] sm:$0xff]
        %v236 = vld [vmem:[%s212 + $0x8] sm:$0xff]
        %v237 = vld [vmem:[%s212 + $0x10] sm:$0xff]
        %v238 = vld [vmem:[%s212 + $0x18] sm:$0xff]
        %v239 = vld [vmem:[%s212 + $0x20] sm:$0xff]
        %v240 = vld [vmem:[%s212 + $0x28] sm:$0xff]
        %v241 = vld [vmem:[%s212 + $0x30] sm:$0xff]
        %v242 = vld [vmem:[%s212 + $0x38] sm:$0xff]
        %v243 = vld [vmem:[%s212 + $0x40] sm:$0xff]
        %v244 = vld [vmem:[%s212 + $0x48] sm:$0xff]
        %v245 = vld [vmem:[%s212 + $0x50] sm:$0xff]
        %v246 = vld [vmem:[%s212 + $0x58] sm:$0xff]
        %v247 = vld [vmem:[%s212 + $0x60] sm:$0xff]
        %v248 = vld [vmem:[%s212 + $0x68] sm:$0xff]
        %v249 = vld [vmem:[%s212 + $0x70] sm:$0xff]
        %v250 = vld [vmem:[%s212 + $0x78] sm:$0xff]
        %v251 = vld [vmem:[%s212 + $0x80] sm:$0xff]
        %v252 = vld [vmem:[%s212 + $0x88] sm:$0xff]
        %v253 = vld [vmem:[%s212 + $0x90] sm:$0xff]
        %v254 = vld [vmem:[%s212 + $0x98] sm:$0xff]
        %v255 = vld [vmem:[%s212 + $0xa0] sm:$0xff]
        %v256 = vld [vmem:[%s212 + $0xa8] sm:$0xff]
        %v257 = vld [vmem:[%s212 + $0xb0] sm:$0xff]
        %v258 = vld [vmem:[%s212 + $0xb8] sm:$0xff]
        %v259 = vld [vmem:[%s212 + $0xc0] sm:$0xff]
        %v260 = vld [vmem:[%s212 + $0xc8] sm:$0xff]
        %v261 = vld [vmem:[%s212 + $0xd0] sm:$0xff]
        %v262 = vld [vmem:[%s212 + $0xd8] sm:$0xff]
        %v263 = vld [vmem:[%s212 + $0xe0] sm:$0xff]
        %v264 = vld [vmem:[%s212 + $0xe8] sm:$0xff]
        %v265 = vld [vmem:[%s212 + $0xf0] sm:$0xff]
        %v266 = vld [vmem:[%s212 + $0xf8] sm:$0xff]
        %v267 = vld [vmem:[#allocation2] sm:$0xff]
        %v268 = vld [vmem:[#allocation2 + $0x8] sm:$0xff]
        %v269 = vld [vmem:[#allocation2 + $0x10] sm:$0xff]
        %v270 = vld [vmem:[#allocation2 + $0x18] sm:$0xff]
        %v271 = vld [vmem:[#allocation2 + $0x20] sm:$0xff]
        %v272 = vld [vmem:[#allocation2 + $0x28] sm:$0xff]
        %v273 = vld [vmem:[#allocation2 + $0x30] sm:$0xff]
        %v274 = vld [vmem:[#allocation2 + $0x38] sm:$0xff]
        %v275 = vld [vmem:[#allocation2 + $0x40] sm:$0xff]
        %v276 = vld [vmem:[#allocation2 + $0x48] sm:$0xff]
        %v277 = vld [vmem:[#allocation2 + $0x50] sm:$0xff]
        %v278 = vld [vmem:[#allocation2 + $0x58] sm:$0xff]
        %v279 = vld [vmem:[#allocation2 + $0x60] sm:$0xff]
        %v280 = vld [vmem:[#allocation2 + $0x68] sm:$0xff]
        %v281 = vld [vmem:[#allocation2 + $0x70] sm:$0xff]
        %v282 = vld [vmem:[#allocation2 + $0x78] sm:$0xff]
        %v283 = vld [vmem:[#allocation2 + $0x80] sm:$0xff]
        %v284 = vld [vmem:[#allocation2 + $0x88] sm:$0xff]
        %v285 = vld [vmem:[#allocation2 + $0x90] sm:$0xff]
        %v286 = vld [vmem:[#allocation2 + $0x98] sm:$0xff]
        %v287 = vld [vmem:[#allocation2 + $0xa0] sm:$0xff]
        %v288 = vld [vmem:[#allocation2 + $0xa8] sm:$0xff]
        %v289 = vld [vmem:[#allocation2 + $0xb0] sm:$0xff]
        %v290 = vld [vmem:[#allocation2 + $0xb8] sm:$0xff]
        %v291 = vld [vmem:[#allocation2 + $0xc0] sm:$0xff]
        %v292 = vld [vmem:[#allocation2 + $0xc8] sm:$0xff]
        %v293 = vld [vmem:[#allocation2 + $0xd0] sm:$0xff]
        %v294 = vld [vmem:[#allocation2 + $0xd8] sm:$0xff]
        %v295 = vld [vmem:[#allocation2 + $0xe0] sm:$0xff]
        %v296 = vld [vmem:[#allocation2 + $0xe8] sm:$0xff]
        %v297 = vld [vmem:[#allocation2 + $0xf0] sm:$0xff]
        %v298 = vld [vmem:[#allocation2 + $0xf8] sm:$0xff]
        %v299 = vld [vmem:[#allocation2 + $0x100] sm:$0x1]
        %v300 = vld [vmem:[#allocation2 + $0x108] sm:$0x1]
        %301 = vmatpush.msra.mxu0 %v250
        %302 = vmatpush.msra.mxu0 %v249
        %303 = vmatpush.msra.mxu0 %v248
        %304 = vmatpush.msra.mxu0 %v247
        %305 = vmatpush.msra.mxu0 %v246
        %306 = vmatpush.msra.mxu0 %v245
        %307 = vmatpush.msra.mxu0 %v244
        %308 = vmatpush.msra.mxu0 %v243
        %309 = vmatpush.msra.mxu0 %v242
        %310 = vmatpush.msra.mxu0 %v241
        %311 = vmatpush.msra.mxu0 %v240
        %312 = vmatpush.msra.mxu0 %v239
        %313 = vmatpush.msra.mxu0 %v238
        %314 = vmatpush.msra.mxu0 %v237
        %315 = vmatpush.msra.mxu0 %v236
        %316 = vmatpush.msra.mxu0 %v235
        %317 = vmatmul.f32.gmra.mxu0 %v267
        %v318 = vpop.f32.mrf.mxu0
        %v319 = vadd.f32 0.0, %v318
        %320 = vmatmul.f32.gmra.mxu0 %v269
        %v321 = vpop.f32.mrf.mxu0
        %v322 = vadd.f32 0.0, %v321
        %323 = vmatmul.f32.gmra.mxu0 %v271
        %v324 = vpop.f32.mrf.mxu0
        %v325 = vadd.f32 0.0, %v324
        %326 = vmatmul.f32.gmra.mxu0 %v273
        %v327 = vpop.f32.mrf.mxu0
        %v328 = vadd.f32 0.0, %v327
        %329 = vmatmul.f32.gmra.mxu0 %v275
        %v330 = vpop.f32.mrf.mxu0
        %v331 = vadd.f32 0.0, %v330
        %332 = vmatmul.f32.gmra.mxu0 %v277
        %v333 = vpop.f32.mrf.mxu0
        %v334 = vadd.f32 0.0, %v333
        %335 = vmatmul.f32.gmra.mxu0 %v279
        %v336 = vpop.f32.mrf.mxu0
        %v337 = vadd.f32 0.0, %v336
        %338 = vmatmul.f32.gmra.mxu0 %v281
        %v339 = vpop.f32.mrf.mxu0
        %v340 = vadd.f32 0.0, %v339
        %341 = vmatmul.f32.gmra.mxu0 %v283
        %v342 = vpop.f32.mrf.mxu0
        %v343 = vadd.f32 0.0, %v342
        %344 = vmatmul.f32.gmra.mxu0 %v285
        %v345 = vpop.f32.mrf.mxu0
        %v346 = vadd.f32 0.0, %v345
        %347 = vmatmul.f32.gmra.mxu0 %v287
        %v348 = vpop.f32.mrf.mxu0
        %v349 = vadd.f32 0.0, %v348
        %350 = vmatmul.f32.gmra.mxu0 %v289
        %v351 = vpop.f32.mrf.mxu0
        %v352 = vadd.f32 0.0, %v351
        %353 = vmatmul.f32.gmra.mxu0 %v291
        %v354 = vpop.f32.mrf.mxu0
        %v355 = vadd.f32 0.0, %v354
        %356 = vmatmul.f32.gmra.mxu0 %v293
        %v357 = vpop.f32.mrf.mxu0
        %v358 = vadd.f32 0.0, %v357
        %359 = vmatmul.f32.gmra.mxu0 %v295
        %v360 = vpop.f32.mrf.mxu0
        %v361 = vadd.f32 0.0, %v360
        %362 = vmatmul.f32.gmra.mxu0 %v297
        %v363 = vpop.f32.mrf.mxu0
        %v364 = vadd.f32 0.0, %v363
        %365 = vmatmul.f32.gmra.mxu0 %v299
        %v366 = vpop.f32.mrf.mxu0
        %v367 = vadd.f32 0.0, %v366
        %368 = vdwg.mxu0
        %369 = vmatpush.msra.mxu0 %v266
        %370 = vmatpush.msra.mxu0 %v265
        %371 = vmatpush.msra.mxu0 %v264
        %372 = vmatpush.msra.mxu0 %v263
        %373 = vmatpush.msra.mxu0 %v262
        %374 = vmatpush.msra.mxu0 %v261
        %375 = vmatpush.msra.mxu0 %v260
        %376 = vmatpush.msra.mxu0 %v259
        %377 = vmatpush.msra.mxu0 %v258
        %378 = vmatpush.msra.mxu0 %v257
        %379 = vmatpush.msra.mxu0 %v256
        %380 = vmatpush.msra.mxu0 %v255
        %381 = vmatpush.msra.mxu0 %v254
        %382 = vmatpush.msra.mxu0 %v253
        %383 = vmatpush.msra.mxu0 %v252
        %384 = vmatpush.msra.mxu0 %v251
        %385 = vmatmul.f32.gmra.mxu0 %v268
        %v386 = vpop.f32.mrf.mxu0
        %v387 = vadd.f32 %v319, %v386
        %388 = vmatmul.f32.gmra.mxu0 %v270
        %v389 = vpop.f32.mrf.mxu0
        %v390 = vadd.f32 %v322, %v389
        %391 = vmatmul.f32.gmra.mxu0 %v272
        %v392 = vpop.f32.mrf.mxu0
        %v393 = vadd.f32 %v325, %v392
        %394 = vmatmul.f32.gmra.mxu0 %v274
        %v395 = vpop.f32.mrf.mxu0
        %v396 = vadd.f32 %v328, %v395
        %397 = vmatmul.f32.gmra.mxu0 %v276
        %v398 = vpop.f32.mrf.mxu0
        %v399 = vadd.f32 %v331, %v398
        %400 = vmatmul.f32.gmra.mxu0 %v278
        %v401 = vpop.f32.mrf.mxu0
        %v402 = vadd.f32 %v334, %v401
        %403 = vmatmul.f32.gmra.mxu0 %v280
        %v404 = vpop.f32.mrf.mxu0
        %v405 = vadd.f32 %v337, %v404
        %406 = vmatmul.f32.gmra.mxu0 %v282
        %v407 = vpop.f32.mrf.mxu0
        %v408 = vadd.f32 %v340, %v407
        %409 = vmatmul.f32.gmra.mxu0 %v284
        %v410 = vpop.f32.mrf.mxu0
        %v411 = vadd.f32 %v343, %v410
        %412 = vmatmul.f32.gmra.mxu0 %v286
        %v413 = vpop.f32.mrf.mxu0
        %v414 = vadd.f32 %v346, %v413
        %415 = vmatmul.f32.gmra.mxu0 %v288
        %v416 = vpop.f32.mrf.mxu0
        %v417 = vadd.f32 %v349, %v416
        %418 = vmatmul.f32.gmra.mxu0 %v290
        %v419 = vpop.f32.mrf.mxu0
        %v420 = vadd.f32 %v352, %v419
        %421 = vmatmul.f32.gmra.mxu0 %v292
        %v422 = vpop.f32.mrf.mxu0
        %v423 = vadd.f32 %v355, %v422
        %424 = vmatmul.f32.gmra.mxu0 %v294
        %v425 = vpop.f32.mrf.mxu0
        %v426 = vadd.f32 %v358, %v425
        %427 = vmatmul.f32.gmra.mxu0 %v296
        %v428 = vpop.f32.mrf.mxu0
        %v429 = vadd.f32 %v361, %v428
        %430 = vmatmul.f32.gmra.mxu0 %v298
        %v431 = vpop.f32.mrf.mxu0
        %v432 = vadd.f32 %v364, %v431
        %433 = vmatmul.f32.gmra.mxu0 %v300
        %v434 = vpop.f32.mrf.mxu0
        %v435 = vadd.f32 %v367, %v434
        %436 = vdwg.mxu0
        %v437 = vld [vmem:[#allocation4] sm:$0xff]
        %v438 = vld [vmem:[#allocation4 + $0x8] sm:$0xff]
        %v439 = vld [vmem:[#allocation4 + $0x10] sm:$0xff]
        %v440 = vld [vmem:[#allocation4 + $0x18] sm:$0xff]
        %v441 = vld [vmem:[#allocation4 + $0x20] sm:$0xff]
        %v442 = vld [vmem:[#allocation4 + $0x28] sm:$0xff]
        %v443 = vld [vmem:[#allocation4 + $0x30] sm:$0xff]
        %v444 = vld [vmem:[#allocation4 + $0x38] sm:$0xff]
        %v445 = vld [vmem:[#allocation4 + $0x40] sm:$0xff]
        %v446 = vld [vmem:[#allocation4 + $0x48] sm:$0xff]
        %v447 = vld [vmem:[#allocation4 + $0x50] sm:$0xff]
        %v448 = vld [vmem:[#allocation4 + $0x58] sm:$0xff]
        %v449 = vld [vmem:[#allocation4 + $0x60] sm:$0xff]
        %v450 = vld [vmem:[#allocation4 + $0x68] sm:$0xff]
        %v451 = vld [vmem:[#allocation4 + $0x70] sm:$0xff]
        %v452 = vld [vmem:[#allocation4 + $0x78] sm:$0xff]
        %v453 = vld [vmem:[#allocation4 + $0x80] sm:$0xff]
        %v454 = vld [vmem:[#allocation4 + $0x88] sm:$0xff]
        %v455 = vld [vmem:[#allocation4 + $0x90] sm:$0xff]
        %v456 = vld [vmem:[#allocation4 + $0x98] sm:$0xff]
        %v457 = vld [vmem:[#allocation4 + $0xa0] sm:$0xff]
        %v458 = vld [vmem:[#allocation4 + $0xa8] sm:$0xff]
        %v459 = vld [vmem:[#allocation4 + $0xb0] sm:$0xff]
        %v460 = vld [vmem:[#allocation4 + $0xb8] sm:$0xff]
        %v461 = vld [vmem:[#allocation4 + $0xc0] sm:$0xff]
        %v462 = vld [vmem:[#allocation4 + $0xc8] sm:$0xff]
        %v463 = vld [vmem:[#allocation4 + $0xd0] sm:$0xff]
        %v464 = vld [vmem:[#allocation4 + $0xd8] sm:$0xff]
        %v465 = vld [vmem:[#allocation4 + $0xe0] sm:$0xff]
        %v466 = vld [vmem:[#allocation4 + $0xe8] sm:$0xff]
        %v467 = vld [vmem:[#allocation4 + $0xf0] sm:$0xff]
        %v468 = vld [vmem:[#allocation4 + $0xf8] sm:$0xff]
        %v469 = vld [vmem:[#allocation4 + $0x100] sm:$0x1]
        %v470 = vld [vmem:[#allocation4 + $0x108] sm:$0x1]
        %471 = vmatpush.msra.mxu0 %v250
        %472 = vmatpush.msra.mxu0 %v249
        %473 = vmatpush.msra.mxu0 %v248
        %474 = vmatpush.msra.mxu0 %v247
        %475 = vmatpush.msra.mxu0 %v246
        %476 = vmatpush.msra.mxu0 %v245
        %477 = vmatpush.msra.mxu0 %v244
        %478 = vmatpush.msra.mxu0 %v243
        %479 = vmatpush.msra.mxu0 %v242
        %480 = vmatpush.msra.mxu0 %v241
        %481 = vmatpush.msra.mxu0 %v240
        %482 = vmatpush.msra.mxu0 %v239
        %483 = vmatpush.msra.mxu0 %v238
        %484 = vmatpush.msra.mxu0 %v237
        %485 = vmatpush.msra.mxu0 %v236
        %486 = vmatpush.msra.mxu0 %v235
        %487 = vmatmul.f32.gmra.mxu0 %v437
        %v488 = vpop.f32.mrf.mxu0
        %v489 = vadd.f32 0.0, %v488
        %490 = vmatmul.f32.gmra.mxu0 %v439
        %v491 = vpop.f32.mrf.mxu0
        %v492 = vadd.f32 0.0, %v491
        %493 = vmatmul.f32.gmra.mxu0 %v441
        %v494 = vpop.f32.mrf.mxu0
        %v495 = vadd.f32 0.0, %v494
        %496 = vmatmul.f32.gmra.mxu0 %v443
        %v497 = vpop.f32.mrf.mxu0
        %v498 = vadd.f32 0.0, %v497
        %499 = vmatmul.f32.gmra.mxu0 %v445
        %v500 = vpop.f32.mrf.mxu0
        %v501 = vadd.f32 0.0, %v500
        %502 = vmatmul.f32.gmra.mxu0 %v447
        %v503 = vpop.f32.mrf.mxu0
        %v504 = vadd.f32 0.0, %v503
        %505 = vmatmul.f32.gmra.mxu0 %v449
        %v506 = vpop.f32.mrf.mxu0
        %v507 = vadd.f32 0.0, %v506
        %508 = vmatmul.f32.gmra.mxu0 %v451
        %v509 = vpop.f32.mrf.mxu0
        %v510 = vadd.f32 0.0, %v509
        %511 = vmatmul.f32.gmra.mxu0 %v453
        %v512 = vpop.f32.mrf.mxu0
        %v513 = vadd.f32 0.0, %v512
        %514 = vmatmul.f32.gmra.mxu0 %v455
        %v515 = vpop.f32.mrf.mxu0
        %v516 = vadd.f32 0.0, %v515
        %517 = vmatmul.f32.gmra.mxu0 %v457
        %v518 = vpop.f32.mrf.mxu0
        %v519 = vadd.f32 0.0, %v518
        %520 = vmatmul.f32.gmra.mxu0 %v459
        %v521 = vpop.f32.mrf.mxu0
        %v522 = vadd.f32 0.0, %v521
        %523 = vmatmul.f32.gmra.mxu0 %v461
        %v524 = vpop.f32.mrf.mxu0
        %v525 = vadd.f32 0.0, %v524
        %526 = vmatmul.f32.gmra.mxu0 %v463
        %v527 = vpop.f32.mrf.mxu0
        %v528 = vadd.f32 0.0, %v527
        %529 = vmatmul.f32.gmra.mxu0 %v465
        %v530 = vpop.f32.mrf.mxu0
        %v531 = vadd.f32 0.0, %v530
        %532 = vmatmul.f32.gmra.mxu0 %v467
        %v533 = vpop.f32.mrf.mxu0
        %v534 = vadd.f32 0.0, %v533
        %535 = vmatmul.f32.gmra.mxu0 %v469
        %v536 = vpop.f32.mrf.mxu0
        %v537 = vadd.f32 0.0, %v536
        %538 = vdwg.mxu0
        %539 = vmatpush.msra.mxu0 %v266
        %540 = vmatpush.msra.mxu0 %v265
        %541 = vmatpush.msra.mxu0 %v264
        %542 = vmatpush.msra.mxu0 %v263
        %543 = vmatpush.msra.mxu0 %v262
        %544 = vmatpush.msra.mxu0 %v261
        %545 = vmatpush.msra.mxu0 %v260
        %546 = vmatpush.msra.mxu0 %v259
        %547 = vmatpush.msra.mxu0 %v258
        %548 = vmatpush.msra.mxu0 %v257
        %549 = vmatpush.msra.mxu0 %v256
        %550 = vmatpush.msra.mxu0 %v255
        %551 = vmatpush.msra.mxu0 %v254
        %552 = vmatpush.msra.mxu0 %v253
        %553 = vmatpush.msra.mxu0 %v252
        %554 = vmatpush.msra.mxu0 %v251
        %555 = vmatmul.f32.gmra.mxu0 %v438
        %v556 = vpop.f32.mrf.mxu0
        %v557 = vadd.f32 %v489, %v556
        %558 = vmatmul.f32.gmra.mxu0 %v440
        %v559 = vpop.f32.mrf.mxu0
        %v560 = vadd.f32 %v492, %v559
        %561 = vmatmul.f32.gmra.mxu0 %v442
        %v562 = vpop.f32.mrf.mxu0
        %v563 = vadd.f32 %v495, %v562
        %564 = vmatmul.f32.gmra.mxu0 %v444
        %v565 = vpop.f32.mrf.mxu0
        %v566 = vadd.f32 %v498, %v565
        %567 = vmatmul.f32.gmra.mxu0 %v446
        %v568 = vpop.f32.mrf.mxu0
        %v569 = vadd.f32 %v501, %v568
        %570 = vmatmul.f32.gmra.mxu0 %v448
        %v571 = vpop.f32.mrf.mxu0
        %v572 = vadd.f32 %v504, %v571
        %573 = vmatmul.f32.gmra.mxu0 %v450
        %v574 = vpop.f32.mrf.mxu0
        %v575 = vadd.f32 %v507, %v574
        %576 = vmatmul.f32.gmra.mxu0 %v452
        %v577 = vpop.f32.mrf.mxu0
        %v578 = vadd.f32 %v510, %v577
        %579 = vmatmul.f32.gmra.mxu0 %v454
        %v580 = vpop.f32.mrf.mxu0
        %v581 = vadd.f32 %v513, %v580
        %582 = vmatmul.f32.gmra.mxu0 %v456
        %v583 = vpop.f32.mrf.mxu0
        %v584 = vadd.f32 %v516, %v583
        %585 = vmatmul.f32.gmra.mxu0 %v458
        %v586 = vpop.f32.mrf.mxu0
        %v587 = vadd.f32 %v519, %v586
        %588 = vmatmul.f32.gmra.mxu0 %v460
        %v589 = vpop.f32.mrf.mxu0
        %v590 = vadd.f32 %v522, %v589
        %591 = vmatmul.f32.gmra.mxu0 %v462
        %v592 = vpop.f32.mrf.mxu0
        %v593 = vadd.f32 %v525, %v592
        %594 = vmatmul.f32.gmra.mxu0 %v464
        %v595 = vpop.f32.mrf.mxu0
        %v596 = vadd.f32 %v528, %v595
        %597 = vmatmul.f32.gmra.mxu0 %v466
        %v598 = vpop.f32.mrf.mxu0
        %v599 = vadd.f32 %v531, %v598
        %600 = vmatmul.f32.gmra.mxu0 %v468
        %v601 = vpop.f32.mrf.mxu0
        %v602 = vadd.f32 %v534, %v601
        %603 = vmatmul.f32.gmra.mxu0 %v470
        %v604 = vpop.f32.mrf.mxu0
        %v605 = vadd.f32 %v537, %v604
        %606 = vdwg.mxu0
        %v607 = vmul.f32 %v387, %v387
        %v608 = vmul.f32 %v390, %v390
        %v609 = vmul.f32 %v393, %v393
        %v610 = vmul.f32 %v396, %v396
        %v611 = vmul.f32 %v399, %v399
        %v612 = vmul.f32 %v402, %v402
        %v613 = vmul.f32 %v405, %v405
        %v614 = vmul.f32 %v408, %v408
        %v615 = vmul.f32 %v411, %v411
        %v616 = vmul.f32 %v414, %v414
        %v617 = vmul.f32 %v417, %v417
        %v618 = vmul.f32 %v420, %v420
        %v619 = vmul.f32 %v423, %v423
        %v620 = vmul.f32 %v426, %v426
        %v621 = vmul.f32 %v429, %v429
        %v622 = vmul.f32 %v432, %v432
        %v623 = vmul.f32 %v435, %v435
        %v624 = vmul.f32 %v557, %v557
        %v625 = vmul.f32 %v560, %v560
        %v626 = vmul.f32 %v563, %v563
        %v627 = vmul.f32 %v566, %v566
        %v628 = vmul.f32 %v569, %v569
        %v629 = vmul.f32 %v572, %v572
        %v630 = vmul.f32 %v575, %v575
        %v631 = vmul.f32 %v578, %v578
        %v632 = vmul.f32 %v581, %v581
        %v633 = vmul.f32 %v584, %v584
        %v634 = vmul.f32 %v587, %v587
        %v635 = vmul.f32 %v590, %v590
        %v636 = vmul.f32 %v593, %v593
        %v637 = vmul.f32 %v596, %v596
        %v638 = vmul.f32 %v599, %v599
        %v639 = vmul.f32 %v602, %v602
        %v640 = vmul.f32 %v605, %v605
        %v641 = vadd.f32 %v607, %v624
        %v642 = vadd.f32 %v608, %v625
        %v643 = vadd.f32 %v609, %v626
        %v644 = vadd.f32 %v610, %v627
        %v645 = vadd.f32 %v611, %v628
        %v646 = vadd.f32 %v612, %v629
        %v647 = vadd.f32 %v613, %v630
        %v648 = vadd.f32 %v614, %v631
        %v649 = vadd.f32 %v615, %v632
        %v650 = vadd.f32 %v616, %v633
        %v651 = vadd.f32 %v617, %v634
        %v652 = vadd.f32 %v618, %v635
        %v653 = vadd.f32 %v619, %v636
        %v654 = vadd.f32 %v620, %v637
        %v655 = vadd.f32 %v621, %v638
        %v656 = vadd.f32 %v622, %v639
        %v657 = vadd.f32 %v623, %v640
        %v658 = vrsqrt.pop %v641
        %v659 = vmul.f32 %v658, %v641
        %v660 = vmul.f32 %v659, %v658
        %v661 = vmul.f32 0.5, %v660
        %v662 = vsub.f32 1.5, %v661
        %v663 = vmul.f32 %v658, %v662
        %v664 = vmul.f32 %v641, %v663
        %vm665 = vcmp.eq.f32.partialorder %v641, inf
        %v666 = vsel %vm665, %v641, %v664
        %vm667 = vcmp.eq.f32.partialorder %v641, 0.0
        %v668 = vand.u32 %v641, 2147483648
        %v669 = vsel %vm667, %v668, %v666
        %v670 = vrsqrt.pop %v642
        %v671 = vmul.f32 %v670, %v642
        %v672 = vmul.f32 %v671, %v670
        %v673 = vmul.f32 0.5, %v672
        %v674 = vsub.f32 1.5, %v673
        %v675 = vmul.f32 %v670, %v674
        %v676 = vmul.f32 %v642, %v675
        %vm677 = vcmp.eq.f32.partialorder %v642, inf
        %v678 = vsel %vm677, %v642, %v676
        %vm679 = vcmp.eq.f32.partialorder %v642, 0.0
        %v680 = vand.u32 %v642, 2147483648
        %v681 = vsel %vm679, %v680, %v678
        %v682 = vrsqrt.pop %v643
        %v683 = vmul.f32 %v682, %v643
        %v684 = vmul.f32 %v683, %v682
        %v685 = vmul.f32 0.5, %v684
        %v686 = vsub.f32 1.5, %v685
        %v687 = vmul.f32 %v682, %v686
        %v688 = vmul.f32 %v643, %v687
        %vm689 = vcmp.eq.f32.partialorder %v643, inf
        %v690 = vsel %vm689, %v643, %v688
        %vm691 = vcmp.eq.f32.partialorder %v643, 0.0
        %v692 = vand.u32 %v643, 2147483648
        %v693 = vsel %vm691, %v692, %v690
        %v694 = vrsqrt.pop %v644
        %v695 = vmul.f32 %v694, %v644
        %v696 = vmul.f32 %v695, %v694
        %v697 = vmul.f32 0.5, %v696
        %v698 = vsub.f32 1.5, %v697
        %v699 = vmul.f32 %v694, %v698
        %v700 = vmul.f32 %v644, %v699
        %vm701 = vcmp.eq.f32.partialorder %v644, inf
        %v702 = vsel %vm701, %v644, %v700
        %vm703 = vcmp.eq.f32.partialorder %v644, 0.0
        %v704 = vand.u32 %v644, 2147483648
        %v705 = vsel %vm703, %v704, %v702
        %v706 = vrsqrt.pop %v645
        %v707 = vmul.f32 %v706, %v645
        %v708 = vmul.f32 %v707, %v706
        %v709 = vmul.f32 0.5, %v708
        %v710 = vsub.f32 1.5, %v709
        %v711 = vmul.f32 %v706, %v710
        %v712 = vmul.f32 %v645, %v711
        %vm713 = vcmp.eq.f32.partialorder %v645, inf
        %v714 = vsel %vm713, %v645, %v712
        %vm715 = vcmp.eq.f32.partialorder %v645, 0.0
        %v716 = vand.u32 %v645, 2147483648
        %v717 = vsel %vm715, %v716, %v714
        %v718 = vrsqrt.pop %v646
        %v719 = vmul.f32 %v718, %v646
        %v720 = vmul.f32 %v719, %v718
        %v721 = vmul.f32 0.5, %v720
        %v722 = vsub.f32 1.5, %v721
        %v723 = vmul.f32 %v718, %v722
        %v724 = vmul.f32 %v646, %v723
        %vm725 = vcmp.eq.f32.partialorder %v646, inf
        %v726 = vsel %vm725, %v646, %v724
        %vm727 = vcmp.eq.f32.partialorder %v646, 0.0
        %v728 = vand.u32 %v646, 2147483648
        %v729 = vsel %vm727, %v728, %v726
        %v730 = vrsqrt.pop %v647
        %v731 = vmul.f32 %v730, %v647
        %v732 = vmul.f32 %v731, %v730
        %v733 = vmul.f32 0.5, %v732
        %v734 = vsub.f32 1.5, %v733
        %v735 = vmul.f32 %v730, %v734
        %v736 = vmul.f32 %v647, %v735
        %vm737 = vcmp.eq.f32.partialorder %v647, inf
        %v738 = vsel %vm737, %v647, %v736
        %vm739 = vcmp.eq.f32.partialorder %v647, 0.0
        %v740 = vand.u32 %v647, 2147483648
        %v741 = vsel %vm739, %v740, %v738
        %v742 = vrsqrt.pop %v648
        %v743 = vmul.f32 %v742, %v648
        %v744 = vmul.f32 %v743, %v742
        %v745 = vmul.f32 0.5, %v744
        %v746 = vsub.f32 1.5, %v745
        %v747 = vmul.f32 %v742, %v746
        %v748 = vmul.f32 %v648, %v747
        %vm749 = vcmp.eq.f32.partialorder %v648, inf
        %v750 = vsel %vm749, %v648, %v748
        %vm751 = vcmp.eq.f32.partialorder %v648, 0.0
        %v752 = vand.u32 %v648, 2147483648
        %v753 = vsel %vm751, %v752, %v750
        %v754 = vrsqrt.pop %v649
        %v755 = vmul.f32 %v754, %v649
        %v756 = vmul.f32 %v755, %v754
        %v757 = vmul.f32 0.5, %v756
        %v758 = vsub.f32 1.5, %v757
        %v759 = vmul.f32 %v754, %v758
        %v760 = vmul.f32 %v649, %v759
        %vm761 = vcmp.eq.f32.partialorder %v649, inf
        %v762 = vsel %vm761, %v649, %v760
        %vm763 = vcmp.eq.f32.partialorder %v649, 0.0
        %v764 = vand.u32 %v649, 2147483648
        %v765 = vsel %vm763, %v764, %v762
        %v766 = vrsqrt.pop %v650
        %v767 = vmul.f32 %v766, %v650
        %v768 = vmul.f32 %v767, %v766
        %v769 = vmul.f32 0.5, %v768
        %v770 = vsub.f32 1.5, %v769
        %v771 = vmul.f32 %v766, %v770
        %v772 = vmul.f32 %v650, %v771
        %vm773 = vcmp.eq.f32.partialorder %v650, inf
        %v774 = vsel %vm773, %v650, %v772
        %vm775 = vcmp.eq.f32.partialorder %v650, 0.0
        %v776 = vand.u32 %v650, 2147483648
        %v777 = vsel %vm775, %v776, %v774
        %v778 = vrsqrt.pop %v651
        %v779 = vmul.f32 %v778, %v651
        %v780 = vmul.f32 %v779, %v778
        %v781 = vmul.f32 0.5, %v780
        %v782 = vsub.f32 1.5, %v781
        %v783 = vmul.f32 %v778, %v782
        %v784 = vmul.f32 %v651, %v783
        %vm785 = vcmp.eq.f32.partialorder %v651, inf
        %v786 = vsel %vm785, %v651, %v784
        %vm787 = vcmp.eq.f32.partialorder %v651, 0.0
        %v788 = vand.u32 %v651, 2147483648
        %v789 = vsel %vm787, %v788, %v786
        %v790 = vrsqrt.pop %v652
        %v791 = vmul.f32 %v790, %v652
        %v792 = vmul.f32 %v791, %v790
        %v793 = vmul.f32 0.5, %v792
        %v794 = vsub.f32 1.5, %v793
        %v795 = vmul.f32 %v790, %v794
        %v796 = vmul.f32 %v652, %v795
        %vm797 = vcmp.eq.f32.partialorder %v652, inf
        %v798 = vsel %vm797, %v652, %v796
        %vm799 = vcmp.eq.f32.partialorder %v652, 0.0
        %v800 = vand.u32 %v652, 2147483648
        %v801 = vsel %vm799, %v800, %v798
        %v802 = vrsqrt.pop %v653
        %v803 = vmul.f32 %v802, %v653
        %v804 = vmul.f32 %v803, %v802
        %v805 = vmul.f32 0.5, %v804
        %v806 = vsub.f32 1.5, %v805
        %v807 = vmul.f32 %v802, %v806
        %v808 = vmul.f32 %v653, %v807
        %vm809 = vcmp.eq.f32.partialorder %v653, inf
        %v810 = vsel %vm809, %v653, %v808
        %vm811 = vcmp.eq.f32.partialorder %v653, 0.0
        %v812 = vand.u32 %v653, 2147483648
        %v813 = vsel %vm811, %v812, %v810
        %v814 = vrsqrt.pop %v654
        %v815 = vmul.f32 %v814, %v654
        %v816 = vmul.f32 %v815, %v814
        %v817 = vmul.f32 0.5, %v816
        %v818 = vsub.f32 1.5, %v817
        %v819 = vmul.f32 %v814, %v818
        %v820 = vmul.f32 %v654, %v819
        %vm821 = vcmp.eq.f32.partialorder %v654, inf
        %v822 = vsel %vm821, %v654, %v820
        %vm823 = vcmp.eq.f32.partialorder %v654, 0.0
        %v824 = vand.u32 %v654, 2147483648
        %v825 = vsel %vm823, %v824, %v822
        %v826 = vrsqrt.pop %v655
        %v827 = vmul.f32 %v826, %v655
        %v828 = vmul.f32 %v827, %v826
        %v829 = vmul.f32 0.5, %v828
        %v830 = vsub.f32 1.5, %v829
        %v831 = vmul.f32 %v826, %v830
        %v832 = vmul.f32 %v655, %v831
        %vm833 = vcmp.eq.f32.partialorder %v655, inf
        %v834 = vsel %vm833, %v655, %v832
        %vm835 = vcmp.eq.f32.partialorder %v655, 0.0
        %v836 = vand.u32 %v655, 2147483648
        %v837 = vsel %vm835, %v836, %v834
        %v838 = vrsqrt.pop %v656
        %v839 = vmul.f32 %v838, %v656
        %v840 = vmul.f32 %v839, %v838
        %v841 = vmul.f32 0.5, %v840
        %v842 = vsub.f32 1.5, %v841
        %v843 = vmul.f32 %v838, %v842
        %v844 = vmul.f32 %v656, %v843
        %vm845 = vcmp.eq.f32.partialorder %v656, inf
        %v846 = vsel %vm845, %v656, %v844
        %vm847 = vcmp.eq.f32.partialorder %v656, 0.0
        %v848 = vand.u32 %v656, 2147483648
        %v849 = vsel %vm847, %v848, %v846
        %v850 = vrsqrt.pop %v657
        %v851 = vmul.f32 %v850, %v657
        %v852 = vmul.f32 %v851, %v850
        %v853 = vmul.f32 0.5, %v852
        %v854 = vsub.f32 1.5, %v853
        %v855 = vmul.f32 %v850, %v854
        %v856 = vmul.f32 %v657, %v855
        %vm857 = vcmp.eq.f32.partialorder %v657, inf
        %v858 = vsel %vm857, %v657, %v856
        %vm859 = vcmp.eq.f32.partialorder %v657, 0.0
        %v860 = vand.u32 %v657, 2147483648
        %v861 = vsel %vm859, %v860, %v858
        %862 = vst [vmem:[%s234] sm:$0xff] %v669
        %863 = vst [vmem:[%s234 + $0x8] sm:$0xff] %v681
        %864 = vst [vmem:[%s234 + $0x10] sm:$0xff] %v693
        %865 = vst [vmem:[%s234 + $0x18] sm:$0xff] %v705
        %866 = vst [vmem:[%s234 + $0x20] sm:$0xff] %v717
        %867 = vst [vmem:[%s234 + $0x28] sm:$0xff] %v729
        %868 = vst [vmem:[%s234 + $0x30] sm:$0xff] %v741
        %869 = vst [vmem:[%s234 + $0x38] sm:$0xff] %v753
        %870 = vst [vmem:[%s234 + $0x40] sm:$0xff] %v765
        %871 = vst [vmem:[%s234 + $0x48] sm:$0xff] %v777
        %872 = vst [vmem:[%s234 + $0x50] sm:$0xff] %v789
        %873 = vst [vmem:[%s234 + $0x58] sm:$0xff] %v801
        %874 = vst [vmem:[%s234 + $0x60] sm:$0xff] %v813
        %875 = vst [vmem:[%s234 + $0x68] sm:$0xff] %v825
        %876 = vst [vmem:[%s234 + $0x70] sm:$0xff] %v837
        %877 = vst [vmem:[%s234 + $0x78] sm:$0xff] %v849
        %878 = vst [vmem:[%s234 + $0x80] sm:$0x1] %v861
        %s879 = sand.u32 %s108, 1
        %s880 = sand.u32 %s108, 1
        %s881 = smul.addr %s880, 136
        %s882 = scalar_lea.vmem [#allocation7], %s881
        // Predicated region
        $region45: #{tpu_custom_call.1} parent=31 // pred_check
          %p883 = pneg %p118
        $region46: #{tpu_custom_call.1} parent=31 // pred_check_branch
          %885 = sbr.rel (%p883) target = $region48
        $region47: #{tpu_custom_call.1} parent=31 // pred_region
          %s886 = smul.addr %s20, 34
          %s887 = sadd.s32 %s21, %s886
          %s888 = smul.addr %s887, 8
          %s889 = scalar_lea.vmem %s3, %s888
          // Predicated region
          $region49: #{tpu_custom_call.1} parent=47 // pred_check
            _
          $region50: #{tpu_custom_call.1} parent=47 // pred_check_branch
            %891 = sbr.rel (0) target = $region52
          $region51: #{tpu_custom_call.1} parent=47 // pred_region
            // Predicated region
            $region53: #{tpu_custom_call.1} parent=51 // pred_check
              _
            $region54: #{tpu_custom_call.1} parent=51 // pred_check_branch
              %893 = sbr.rel (0) target = $region56
            $region55: #{tpu_custom_call.1} parent=51 // pred_region
              // Predicated region
              $region68: #{tpu_custom_call.1} parent=55 // pred_check
                _
              $region69: #{tpu_custom_call.1} parent=55 // pred_check_branch
                %941 = sbr.rel (0) target = $region71
              $region70: #{tpu_custom_call.1} parent=55 // pred_region
                loop: start=0, step=1, limit=1
                $region72: #{tpu_custom_call.1} parent=70 // loop_pre_header
                  _
                $region73: #{tpu_custom_call.1} parent=70 // loop_header
                  %s943 = sphi 0, %s947
                  %p944 = scmp.ge.s32.totalorder %s943, 1
                  %s948 = sphi %s882, %s882
                  %s949 = sphi %s889, %s889
                $region74: #{tpu_custom_call.1} parent=70 // loop_header_branch
                  %946 = sbr.rel (%p944) target = $region78
                $region75: #{tpu_custom_call.1} parent=70 // loop_body
                  %v950 = vld [vmem:[%s948] sm:$0xff]
                  %951 = vst [vmem:[%s949] sm:$0xff] %v950
                  %v952 = vld [vmem:[%s948 + $0x8] sm:$0xff]
                  %953 = vst [vmem:[%s949 + $0x10] sm:$0xff] %v952
                  %v954 = vld [vmem:[%s948 + $0x10] sm:$0xff]
                  %955 = vst [vmem:[%s949 + $0x20] sm:$0xff] %v954
                  %v956 = vld [vmem:[%s948 + $0x18] sm:$0xff]
                  %957 = vst [vmem:[%s949 + $0x30] sm:$0xff] %v956
                  %v958 = vld [vmem:[%s948 + $0x20] sm:$0xff]
                  %959 = vst [vmem:[%s949 + $0x40] sm:$0xff] %v958
                  %v960 = vld [vmem:[%s948 + $0x28] sm:$0xff]
                  %961 = vst [vmem:[%s949 + $0x50] sm:$0xff] %v960
                  %v962 = vld [vmem:[%s948 + $0x30] sm:$0xff]
                  %963 = vst [vmem:[%s949 + $0x60] sm:$0xff] %v962
                  %v964 = vld [vmem:[%s948 + $0x38] sm:$0xff]
                  %965 = vst [vmem:[%s949 + $0x70] sm:$0xff] %v964
                  %v966 = vld [vmem:[%s948 + $0x40] sm:$0xff]
                  %967 = vst [vmem:[%s949 + $0x80] sm:$0xff] %v966
                  %v968 = vld [vmem:[%s948 + $0x48] sm:$0xff]
                  %969 = vst [vmem:[%s949 + $0x90] sm:$0xff] %v968
                  %v970 = vld [vmem:[%s948 + $0x50] sm:$0xff]
                  %971 = vst [vmem:[%s949 + $0xa0] sm:$0xff] %v970
                  %v972 = vld [vmem:[%s948 + $0x58] sm:$0xff]
                  %973 = vst [vmem:[%s949 + $0xb0] sm:$0xff] %v972
                  %v974 = vld [vmem:[%s948 + $0x60] sm:$0xff]
                  %975 = vst [vmem:[%s949 + $0xc0] sm:$0xff] %v974
                  %v976 = vld [vmem:[%s948 + $0x68] sm:$0xff]
                  %977 = vst [vmem:[%s949 + $0xd0] sm:$0xff] %v976
                  %v978 = vld [vmem:[%s948 + $0x70] sm:$0xff]
                  %979 = vst [vmem:[%s949 + $0xe0] sm:$0xff] %v978
                  %v980 = vld [vmem:[%s948 + $0x78] sm:$0xff]
                  %981 = vst [vmem:[%s949 + $0xf0] sm:$0xff] %v980
                  %v982 = vld [vmem:[%s948 + $0x80] sm:$0xff]
                  %983 = vst [vmem:[%s949 + $0x100] sm:$0xff] %v982
                $region76: #{tpu_custom_call.1} parent=70 // loop_footer
                  %s947 = sadd.s32 1, %s943
                $region77: #{tpu_custom_call.1} parent=70 // loop_footer_branch
                  %942 = sbr.rel target = $region73
                $region78: #{tpu_custom_call.1} parent=70 // loop_exit
                  _
              $region71: #{tpu_custom_call.1} parent=55 // pred_fallthru
                _
              // Predicated region
              $region79: #{tpu_custom_call.1} parent=55 // pred_check
                _
              $region80: #{tpu_custom_call.1} parent=55 // pred_check_branch
                %985 = sbr.rel target = $region82
              $region81: #{tpu_custom_call.1} parent=55 // pred_region
                _
              $region82: #{tpu_custom_call.1} parent=55 // pred_fallthru
                _
            $region56: #{tpu_custom_call.1} parent=51 // pred_fallthru
              _
            // Predicated region
            $region57: #{tpu_custom_call.1} parent=51 // pred_check
              _
            $region58: #{tpu_custom_call.1} parent=51 // pred_check_branch
              %895 = sbr.rel target = $region60
            $region59: #{tpu_custom_call.1} parent=51 // pred_region
              %s897 = ssub.s32 256, 1
              loop: start=0, step=1, limit=1
              $region61: #{tpu_custom_call.1} parent=59 // loop_pre_header
                _
              $region62: #{tpu_custom_call.1} parent=59 // loop_header
                %s899 = sphi 0, %s903
                %p900 = scmp.ge.s32.totalorder %s899, 1
                %s904 = sphi %s882, %s882
                %s905 = sphi %s889, %s889
              $region63: #{tpu_custom_call.1} parent=59 // loop_header_branch
                %902 = sbr.rel (%p900) target = $region67
              $region64: #{tpu_custom_call.1} parent=59 // loop_body
                %v906 = vld [vmem:[%s904] sm:%s897]
                %907 = vst [vmem:[%s905] sm:%s897] %v906
                %v908 = vld [vmem:[%s904 + $0x8] sm:%s897]
                %909 = vst [vmem:[%s905 + $0x10] sm:%s897] %v908
                %v910 = vld [vmem:[%s904 + $0x10] sm:%s897]
                %911 = vst [vmem:[%s905 + $0x20] sm:%s897] %v910
                %v912 = vld [vmem:[%s904 + $0x18] sm:%s897]
                %913 = vst [vmem:[%s905 + $0x30] sm:%s897] %v912
                %v914 = vld [vmem:[%s904 + $0x20] sm:%s897]
                %915 = vst [vmem:[%s905 + $0x40] sm:%s897] %v914
                %v916 = vld [vmem:[%s904 + $0x28] sm:%s897]
                %917 = vst [vmem:[%s905 + $0x50] sm:%s897] %v916
                %v918 = vld [vmem:[%s904 + $0x30] sm:%s897]
                %919 = vst [vmem:[%s905 + $0x60] sm:%s897] %v918
                %v920 = vld [vmem:[%s904 + $0x38] sm:%s897]
                %921 = vst [vmem:[%s905 + $0x70] sm:%s897] %v920
                %v922 = vld [vmem:[%s904 + $0x40] sm:%s897]
                %923 = vst [vmem:[%s905 + $0x80] sm:%s897] %v922
                %v924 = vld [vmem:[%s904 + $0x48] sm:%s897]
                %925 = vst [vmem:[%s905 + $0x90] sm:%s897] %v924
                %v926 = vld [vmem:[%s904 + $0x50] sm:%s897]
                %927 = vst [vmem:[%s905 + $0xa0] sm:%s897] %v926
                %v928 = vld [vmem:[%s904 + $0x58] sm:%s897]
                %929 = vst [vmem:[%s905 + $0xb0] sm:%s897] %v928
                %v930 = vld [vmem:[%s904 + $0x60] sm:%s897]
                %931 = vst [vmem:[%s905 + $0xc0] sm:%s897] %v930
                %v932 = vld [vmem:[%s904 + $0x68] sm:%s897]
                %933 = vst [vmem:[%s905 + $0xd0] sm:%s897] %v932
                %v934 = vld [vmem:[%s904 + $0x70] sm:%s897]
                %935 = vst [vmem:[%s905 + $0xe0] sm:%s897] %v934
                %v936 = vld [vmem:[%s904 + $0x78] sm:%s897]
                %937 = vst [vmem:[%s905 + $0xf0] sm:%s897] %v936
                %v938 = vld [vmem:[%s904 + $0x80] sm:%s897]
                %939 = vst [vmem:[%s905 + $0x100] sm:%s897] %v938
              $region65: #{tpu_custom_call.1} parent=59 // loop_footer
                %s903 = sadd.s32 1, %s899
              $region66: #{tpu_custom_call.1} parent=59 // loop_footer_branch
                %898 = sbr.rel target = $region62
              $region67: #{tpu_custom_call.1} parent=59 // loop_exit
                _
            $region60: #{tpu_custom_call.1} parent=51 // pred_fallthru
              _
          $region52: #{tpu_custom_call.1} parent=47 // pred_fallthru
            _
          %986 = vnop
        $region48: #{tpu_custom_call.1} parent=31 // pred_fallthru
          _
      $region32: #{tpu_custom_call.1} parent=5 // pred_fallthru
        _
      %p987 = scmp.le.s32.totalorder 2, %s11
      // Predicated region
      $region83: #{tpu_custom_call.1} parent=5 // pred_check
        %p988 = pneg %p987
      $region84: #{tpu_custom_call.1} parent=5 // pred_check_branch
        %990 = sbr.rel (%p988) target = $region86
      $region85: #{tpu_custom_call.1} parent=5 // pred_region
        %s991 = ssub.s32 %s11, 2
        // Predicated region
        $region87: #{tpu_custom_call.1} parent=85 // pred_check
          %p992 = pneg %p124
        $region88: #{tpu_custom_call.1} parent=85 // pred_check_branch
          %994 = sbr.rel (%p992) target = $region90
        $region89: #{tpu_custom_call.1} parent=85 // pred_region
          %s995 = sand.u32 %s109, 1
          %s996 = sand.u32 %s109, 1
          %s997 = smul.addr %s996, 136
          %s998 = scalar_lea.vmem [#allocation7], %s997
        $region90: #{tpu_custom_call.1} parent=85 // pred_fallthru
          _
      $region86: #{tpu_custom_call.1} parent=5 // pred_fallthru
        _
    $region6: #{tpu_custom_call.1} parent=1 // loop_footer
      %s15 = sadd.s32 1, %s11
    $region7: #{tpu_custom_call.1} parent=1 // loop_footer_branch
      %10 = sbr.rel target = $region3
    $region8: #{tpu_custom_call.1} parent=1 // loop_exit
      _
    %999 = vsyncpa [#allocation3], 1
    %s1000 = scalar_lea.sflag [#allocation3], 1
    %1001 = vsyncpa %s1000, 1
    %1002 = vsyncpa [#allocation5], 1

</llo_original>
